<compile_context>
chip_gen: v7x
topology: tpu7x:2x2x1
jax: 0.10.0
libtpu: 0.0.40
codegen_flags: <defaults>
</compile_context>

<pallas_src>
import numpy as np
import jax
import jax.numpy as jnp
from jax.experimental import pallas as pl
from jax.experimental.pallas import tpu as pltpu


def _cdiv(a, b):
    return -(-a // b)


def _round_up(n, m):
    return _cdiv(n, m) * m


def _pick_tm(M, row_tile, sub=16):
    """Token tile: multiple of `sub` (bf16 sublane packing), <= row_tile.
    Prefers (a) dividing M exactly (no pad / slice copies) and (b) giving at
    least 2 grid steps (v7x: 2 TensorCores)."""
    target = max(sub, min(_round_up(row_tile, sub), _round_up(_cdiv(M, 2), sub)))
    if M % sub == 0:
        t = target
        while t >= sub:
            if M % t == 0:
                return t
            t -= sub
    return target


def _pick_th(hidden, cap=512):
    """Hidden (reduction) tile: multiple of 128 that divides hidden, <= cap."""
    if hidden % 128 != 0:
        return hidden                    # full-extent block is always legal
    th = max(128, (min(cap, hidden) // 128) * 128)
    while hidden % th:
        th -= 128
    return th


def gated_mlp_kernel(x_ref, wg_ref, wv_ref, ws_ref, o_ref, acc_ref):
    # x_ref:   (tm, dim)  bf16
    # wg_ref:  (dim, th)  bf16  gate half of the grow weight
    # wv_ref:  (dim, th)  bf16  value half of the grow weight
    # ws_ref:  (th, dim)  bf16  shrink weight
    # o_ref:   (tm, dim)  output dtype
    # acc_ref: (tm, dim)  f32 accumulator over the hidden (k) grid axis
    k = pl.program_id(1)

    @pl.when(k == 0)
    def _init():
        acc_ref[...] = jnp.zeros_like(acc_ref)

    x = x_ref[...]
    gate = jnp.dot(x, wg_ref[...], preferred_element_type=jnp.float32)
    val = jnp.dot(x, wv_ref[...], preferred_element_type=jnp.float32)
    # tanh gelu -> EUP (own VLIW slot); elementwise math kept in f32 (v5e).
    h = jax.nn.gelu(gate, approximate=True) * val
    acc_ref[...] += jnp.dot(h.astype(jnp.bfloat16), ws_ref[...],
                            preferred_element_type=jnp.float32)

    @pl.when(k == pl.num_programs(1) - 1)
    def _finalize():
        o_ref[...] = acc_ref[...].astype(o_ref.dtype)


def gated_mlp_forward(x, params, *, row_tile=512, hidden_tile=512):
    """x: (..., dim) -> (..., dim), matching GatedMLP.forward."""
    w_gate = params["w_gate"]      # (dim, hidden)  bf16
    w_val = params["w_val"]        # (dim, hidden)  bf16
    w_shrink = params["w_shrink"]  # (hidden, dim)  bf16
    dim = x.shape[-1]
    hidden = w_gate.shape[1]
    out_dtype = x.dtype

    lead = x.shape[:-1]
    M = int(np.prod(lead)) if lead else 1
    # bf16 MXU operands (f32 accumulation inside the kernel); cast once here so
    # the kernel DMAs half the activation bytes and does no per-step casts.
    xf = x.reshape(M, dim).astype(jnp.bfloat16)

    tm = _pick_tm(M, row_tile)
    Mp = _round_up(M, tm)
    if Mp != M:                      # only for ragged M that no tile divides
        xf = jnp.pad(xf, ((0, Mp - M), (0, 0)))
    th = _pick_th(hidden, hidden_tile)
    num_m = Mp // tm
    num_k = hidden // th

    # VMEM budget: double-buffered tiles + f32 accumulator (+ headroom).
    out_isize = np.dtype(out_dtype).itemsize
    vmem_est = (2 * tm * dim * 2              # x tiles (bf16)
                + 3 * 2 * dim * th * 2        # weight tiles (bf16)
                + 2 * tm * dim * out_isize    # out tiles
                + tm * dim * 4)               # accumulator
    vmem_limit = int(min(max(32 << 20, 2 * vmem_est), 64 << 20))

    cost = pl.CostEstimate(
        flops=2 * M * dim * (2 * hidden) + 2 * M * hidden * dim,
        transcendentals=M * hidden,
        bytes_accessed=(Mp * dim * 2                     # activations in
                        + num_m * 3 * dim * hidden * 2   # weights per token tile
                        + Mp * dim * out_isize),         # output
    )

    out = pl.pallas_call(
        gated_mlp_kernel,
        out_shape=jax.ShapeDtypeStruct((Mp, dim), out_dtype),
        grid=(num_m, num_k),                              # reduction axis last
        in_specs=[
            pl.BlockSpec((tm, dim), lambda i, k: (i, 0)),
            pl.BlockSpec((dim, th), lambda i, k: (0, k)),
            pl.BlockSpec((dim, th), lambda i, k: (0, k)),
            pl.BlockSpec((th, dim), lambda i, k: (k, 0)),
        ],
        out_specs=pl.BlockSpec((tm, dim), lambda i, k: (i, 0)),
        scratch_shapes=[pltpu.VMEM((tm, dim), jnp.float32)],
        compiler_params=pltpu.CompilerParams(
            dimension_semantics=("parallel", "arbitrary"),
            vmem_limit_bytes=vmem_limit),
        cost_estimate=cost,
    )(xf, w_gate, w_val, w_shrink)

    if Mp != M:
        out = out[:M]
    return out.reshape(*lead, dim)


def gated_mlp_reference(x, params):
    """Pure-JAX f32 reference mirroring the PyTorch forward (exact erf gelu)."""
    xf = x.astype(jnp.float32)
    gate = xf @ params["w_gate"].astype(jnp.float32)
    val = xf @ params["w_val"].astype(jnp.float32)
    h = jax.nn.gelu(gate, approximate=False) * val
    return (h @ params["w_shrink"].astype(jnp.float32)).astype(x.dtype)


def make_params(key, dim, hidden):
    """Mirror the PyTorch normal_(std=...) init; store bf16 weights (MXU-native
    dtype) split into lane-aligned gate/value halves (chunk(2, dim=-1) order)."""
    k1, k2 = jax.random.split(key)
    # PyTorch Linear stores (out, in); we store the transposed (in, out) layout.
    w_grow = jax.random.normal(k1, (dim, 2 * hidden), jnp.float32) * dim ** -0.5
    w_shrink = jax.random.normal(k2, (hidden, dim), jnp.float32) * hidden ** -0.5
    return {
        "w_gate": w_grow[:, :hidden].astype(jnp.bfloat16),
        "w_val": w_grow[:, hidden:].astype(jnp.bfloat16),
        "w_shrink": w_shrink.astype(jnp.bfloat16),
    }


if __name__ == "__main__":
    # Small shapes consistent with the module (scaled-down dim, expansion 2).
    batch, seq, dim, expansion_factor = 2, 8, 128, 2
    hidden = int(dim * expansion_factor)

    key = jax.random.PRNGKey(0)
    kx, kp = jax.random.split(key)
    x = jax.random.normal(kx, (batch, seq, dim), jnp.float32)
    params = make_params(kp, dim, hidden)

    out = gated_mlp_forward(x, params)
    out = jax.block_until_ready(out)

    ref = gated_mlp_reference(x, params)
    # bf16 MXU operands + tanh gelu in the kernel vs. the f32 / erf reference:
    # loose but meaningful tolerance.
    np.testing.assert_allclose(np.asarray(out, dtype=np.float32),
                               np.asarray(ref, dtype=np.float32),
                               atol=3e-2, rtol=3e-2)

    print("KERNEL_OK")
</pallas_src>

<mosaic_0001>
module attributes {stable_mosaic.version = 11 : i64} {
  func.func @gated_mlp_kernel(%arg0: i32, %arg1: i32, %arg2: memref<16x128xbf16, #tpu.memory_space<vmem>>, %arg3: memref<128x256xbf16, #tpu.memory_space<vmem>>, %arg4: memref<128x256xbf16, #tpu.memory_space<vmem>>, %arg5: memref<256x128xbf16, #tpu.memory_space<vmem>>, %arg6: memref<16x128xf32, #tpu.memory_space<vmem>>, %arg7: memref<16x128xf32, #tpu.memory_space<vmem>>) attributes {dimension_semantics = [#tpu.dimension_semantics<parallel>, #tpu.dimension_semantics<arbitrary>], iteration_bounds = array<i64: 1, 1>, scalar_prefetch = 0 : i64, scratch_operands = 1 : i64, tpu.core_type = #tpu.core_type<tc>, window_params = [{transform_indices = @transform_0, window_bounds = array<i64: 16, 128>}, {transform_indices = @transform_1, window_bounds = array<i64: 128, 256>}, {transform_indices = @transform_2, window_bounds = array<i64: 128, 256>}, {transform_indices = @transform_3, window_bounds = array<i64: 256, 128>}, {transform_indices = @transform_4, window_bounds = array<i64: 16, 128>}]} {
    %c0_i32 = arith.constant 0 : i32
    %0 = arith.cmpi eq, %arg1, %c0_i32 : i32
    %1 = arith.extui %0 : i1 to i32
    %c0_i32_0 = arith.constant 0 : i32
    %2 = arith.cmpi ne, %1, %c0_i32_0 : i32
    scf.if %2 {
      %cst_20 = arith.constant 0.000000e+00 : f32
      %31 = vector.broadcast %cst_20 : f32 to vector<16x128xf32>
      %c0_21 = arith.constant 0 : index
      %c0_22 = arith.constant 0 : index
      %32 = vector.load %arg7[%c0_21, %c0_22] : memref<16x128xf32, #tpu.memory_space<vmem>>, vector<16x128xf32>
      tpu.vector_store %arg7[%c0_21, %c0_22], %31 {strides = array<i32>} : memref<16x128xf32, #tpu.memory_space<vmem>>, vector<16x128xf32>,
    } else {
    }
    %c0 = arith.constant 0 : index
    %c0_1 = arith.constant 0 : index
    %3 = vector.load %arg2[%c0, %c0_1] : memref<16x128xbf16, #tpu.memory_space<vmem>>, vector<16x128xbf16>
    %c0_2 = arith.constant 0 : index
    %c0_3 = arith.constant 0 : index
    %4 = vector.load %arg3[%c0_2, %c0_3] : memref<128x256xbf16, #tpu.memory_space<vmem>>, vector<128x256xbf16>
    %cst = arith.constant dense<0.000000e+00> : vector<16x256xf32>
    %5 = tpu.matmul %3, %4, %cst {dimension_numbers = #tpu.dot_dimension_numbers<[1], [0], [0], [1], [0, 0, 1, 1], [], []>} : vector<16x128xbf16>, vector<128x256xbf16>, vector<16x256xf32> -> vector<16x256xf32>
    %c0_4 = arith.constant 0 : index
    %c0_5 = arith.constant 0 : index
    %6 = vector.load %arg4[%c0_4, %c0_5] : memref<128x256xbf16, #tpu.memory_space<vmem>>, vector<128x256xbf16>
    %cst_6 = arith.constant dense<0.000000e+00> : vector<16x256xf32>
    %7 = tpu.matmul %3, %6, %cst_6 {dimension_numbers = #tpu.dot_dimension_numbers<[1], [0], [0], [1], [0, 0, 1, 1], [], []>} : vector<16x128xbf16>, vector<128x256xbf16>, vector<16x256xf32> -> vector<16x256xf32>
    %8 = arith.mulf %5, %5 : vector<16x256xf32>
    %9 = arith.mulf %5, %8 : vector<16x256xf32>
    %cst_7 = arith.constant 4.471500e-02 : f32
    %10 = vector.broadcast %cst_7 : f32 to vector<16x256xf32>
    %11 = arith.mulf %10, %9 : vector<16x256xf32>
    %12 = arith.addf %5, %11 : vector<16x256xf32>
    %cst_8 = arith.constant 0.797884583 : f32
    %13 = vector.broadcast %cst_8 : f32 to vector<16x256xf32>
    %14 = arith.mulf %13, %12 : vector<16x256xf32>
    %15 = math.tanh %14 : vector<16x256xf32>
    %cst_9 = arith.constant 1.000000e+00 : f32
    %16 = vector.broadcast %cst_9 : f32 to vector<16x256xf32>
    %17 = arith.addf %16, %15 : vector<16x256xf32>
    %cst_10 = arith.constant 5.000000e-01 : f32
    %18 = vector.broadcast %cst_10 : f32 to vector<16x256xf32>
    %19 = arith.mulf %18, %17 : vector<16x256xf32>
    %20 = arith.mulf %5, %19 : vector<16x256xf32>
    %21 = arith.mulf %20, %7 : vector<16x256xf32>
    %c0_11 = arith.constant 0 : index
    %c0_12 = arith.constant 0 : index
    %22 = vector.load %arg7[%c0_11, %c0_12] : memref<16x128xf32, #tpu.memory_space<vmem>>, vector<16x128xf32>
    %23 = arith.truncf %21 : vector<16x256xf32> to vector<16x256xbf16>
    %c0_13 = arith.constant 0 : index
    %c0_14 = arith.constant 0 : index
    %24 = vector.load %arg5[%c0_13, %c0_14] : memref<256x128xbf16, #tpu.memory_space<vmem>>, vector<256x128xbf16>
    %cst_15 = arith.constant dense<0.000000e+00> : vector<16x128xf32>
    %25 = tpu.matmul %23, %24, %cst_15 {dimension_numbers = #tpu.dot_dimension_numbers<[1], [0], [0], [1], [0, 0, 1, 1], [], []>} : vector<16x256xbf16>, vector<256x128xbf16>, vector<16x128xf32> -> vector<16x128xf32>
    %26 = arith.addf %22, %25 : vector<16x128xf32>
    %c0_16 = arith.constant 0 : index
    %c0_17 = arith.constant 0 : index
    %27 = vector.load %arg7[%c0_16, %c0_17] : memref<16x128xf32, #tpu.memory_space<vmem>>, vector<16x128xf32>
    tpu.vector_store %arg7[%c0_16, %c0_17], %26 {strides = array<i32>} : memref<16x128xf32, #tpu.memory_space<vmem>>, vector<16x128xf32>,
    %c0_i32_18 = arith.constant 0 : i32
    %28 = arith.cmpi eq, %arg1, %c0_i32_18 : i32
    %29 = arith.extui %28 : i1 to i32
    %c0_i32_19 = arith.constant 0 : i32
    %30 = arith.cmpi ne, %29, %c0_i32_19 : i32
    scf.if %30 {
      %c0_20 = arith.constant 0 : index
      %c0_21 = arith.constant 0 : index
      %31 = vector.load %arg7[%c0_20, %c0_21] : memref<16x128xf32, #tpu.memory_space<vmem>>, vector<16x128xf32>
      %c0_22 = arith.constant 0 : index
      %c0_23 = arith.constant 0 : index
      %32 = vector.load %arg6[%c0_22, %c0_23] : memref<16x128xf32, #tpu.memory_space<vmem>>, vector<16x128xf32>
      tpu.vector_store %arg6[%c0_22, %c0_23], %31 {strides = array<i32>} : memref<16x128xf32, #tpu.memory_space<vmem>>, vector<16x128xf32>,
    } else {
    }
    return
  }
  func.func @transform_0(%arg0: i32, %arg1: i32) -> (i32, i32) {
    %c0_i32 = arith.constant 0 : i32
    %c0_i32_0 = arith.constant 0 : i32
    return %arg0, %c0_i32 : i32, i32
  }
  func.func @transform_1(%arg0: i32, %arg1: i32) -> (i32, i32) {
    %c0_i32 = arith.constant 0 : i32
    %c0_i32_0 = arith.constant 0 : i32
    return %c0_i32, %arg1 : i32, i32
  }
  func.func @transform_2(%arg0: i32, %arg1: i32) -> (i32, i32) {
    %c0_i32 = arith.constant 0 : i32
    %c0_i32_0 = arith.constant 0 : i32
    return %c0_i32, %arg1 : i32, i32
  }
  func.func @transform_3(%arg0: i32, %arg1: i32) -> (i32, i32) {
    %c0_i32 = arith.constant 0 : i32
    %c0_i32_0 = arith.constant 0 : i32
    return %arg1, %c0_i32 : i32, i32
  }
  func.func @transform_4(%arg0: i32, %arg1: i32) -> (i32, i32) {
    %c0_i32 = arith.constant 0 : i32
    %c0_i32_0 = arith.constant 0 : i32
    return %arg0, %c0_i32 : i32, i32
  }
}

</mosaic_0001>

<llo_original>
// kernel: tpu_custom_call.1
$region0: #{tpu_custom_call.1}
  #allocation0 [shape = 'u32[]', space=smem, size = 0x4, offset = 0x4, fixed_abs, tag = 'smem constant byte address 0x4 - core index']
  #allocation1 [shape = 'u32[144,128]{1,0:T(1,128)}', space=vmem, size = 0x12000, scoped, tag = 'internal scratch']
  #allocation2 [shape = 'f32[16,128]{1,0:T(8,128)}', space=vmem, size = 0x2000, scoped, tag = 'scratch operand']
  %s0 = inlined_call_operand.hbm [shape: bf16[16,128], index: 0, kind: input, shape index: {}]
  %s1 = inlined_call_operand.hbm [shape: bf16[128,256], index: 1, kind: input, shape index: {}]
  %s2 = inlined_call_operand.hbm [shape: bf16[128,256], index: 2, kind: input, shape index: {}]
  %s3 = inlined_call_operand.hbm [shape: bf16[256,128], index: 3, kind: input, shape index: {}]
  %s4 = inlined_call_operand.hbm [shape: f32[16,128], index: 4, kind: output, shape index: {}]
  %s5 = sld [smem:[#allocation0]]
  $region50: #{tpu_custom_call.1} parent=0
    _
  %s7 = ssub.s32 1, %s5
  %s8 = scalar_select 0, %s7, %s5
  $region1: #{tpu_custom_call.1} parent=0
    #allocation3 [shape = 'u8[4096]{0}', space=vmem, size = 0x1000, scoped, tag = 'input window, operand 0, single buffered']
    #allocation4 [shape = 's32[1]{0}', space=sflag, size = 0x4, scoped, tag = 'scoped memory for tpu_custom_call.1']
    #allocation5 [shape = 's32[1]{0}', space=sflag, size = 0x4, scoped, tag = 'scoped memory for tpu_custom_call.1']
    #allocation6 [shape = 'u8[65536]{0}', space=vmem, size = 0x10000, scoped, tag = 'input window, operand 1, single buffered']
    #allocation7 [shape = 's32[1]{0}', space=sflag, size = 0x4, scoped, tag = 'scoped memory for tpu_custom_call.1']
    #allocation8 [shape = 'u8[65536]{0}', space=vmem, size = 0x10000, scoped, tag = 'input window, operand 2, single buffered']
    #allocation9 [shape = 'u8[65536]{0}', space=vmem, size = 0x10000, scoped, tag = 'input window, operand 3, single buffered']
    #allocation10 [shape = 's32[1]{0}', space=sflag, size = 0x4, scoped, tag = 'scoped memory for tpu_custom_call.1']
    #allocation11 [shape = 'u8[8192]{0}', space=vmem, size = 0x2000, scoped, tag = 'output window, operand 0, single buffered']
    %9 = vsyncpa [#allocation4], 0
    %10 = vsyncpa [#allocation7], 0
    %11 = vsyncpa [#allocation10], 0
    %12 = vsyncpa [#allocation5], 0
    // Predicated region
    $region2: #{tpu_custom_call.1} parent=1 // pred_check
      _
    $region3: #{tpu_custom_call.1} parent=1 // pred_check_branch
      %14 = sbr.rel (0) target = $region5
    $region4: #{tpu_custom_call.1} parent=1 // pred_region
      %s16 = ssub.s32 128, 128
      %17 = vsyncadd [#allocation4], %s16
      %s18 = sshll.u32 [#allocation3], 4
      %s19 = int_to_ptr.vmem [resolvable:$true] %s18
      %24 = dma.hbm_to_vmem [thread:$0]  %s0, 128, %s19, [#allocation4], 64, 64, 4
    $region5: #{tpu_custom_call.1} parent=1 // pred_fallthru
      _
    // Predicated region
    $region6: #{tpu_custom_call.1} parent=1 // pred_check
      _
    $region7: #{tpu_custom_call.1} parent=1 // pred_check_branch
      %26 = sbr.rel (0) target = $region9
    $region8: #{tpu_custom_call.1} parent=1 // pred_region
      %s28 = ssub.s32 2048, 2048
      %29 = vsyncadd [#allocation7], %s28
      %s30 = sshll.u32 [#allocation6], 4
      %s31 = int_to_ptr.vmem [resolvable:$true] %s30
      %36 = dma.hbm_to_vmem [thread:$0]  %s1, 2048, %s31, [#allocation7], 128, 128, 8
    $region9: #{tpu_custom_call.1} parent=1 // pred_fallthru
      _
    // Predicated region
    $region10: #{tpu_custom_call.1} parent=1 // pred_check
      _
    $region11: #{tpu_custom_call.1} parent=1 // pred_check_branch
      %38 = sbr.rel (0) target = $region13
    $region12: #{tpu_custom_call.1} parent=1 // pred_region
      %s40 = ssub.s32 2048, 2048
      %41 = vsyncadd [#allocation7], %s40
      %s42 = sshll.u32 [#allocation8], 4
      %s43 = int_to_ptr.vmem [resolvable:$true] %s42
      %48 = dma.hbm_to_vmem [thread:$0]  %s2, 2048, %s43, [#allocation7], 128, 128, 8
    $region13: #{tpu_custom_call.1} parent=1 // pred_fallthru
      _
    // Predicated region
    $region14: #{tpu_custom_call.1} parent=1 // pred_check
      _
    $region15: #{tpu_custom_call.1} parent=1 // pred_check_branch
      %50 = sbr.rel (0) target = $region17
    $region16: #{tpu_custom_call.1} parent=1 // pred_region
      %s52 = ssub.s32 2048, 2048
      %53 = vsyncadd [#allocation10], %s52
      %s54 = sshll.u32 [#allocation9], 4
      %s55 = int_to_ptr.vmem [resolvable:$true] %s54
      %60 = dma.hbm_to_vmem [thread:$0]  %s3, 2048, %s55, [#allocation10], 64, 64, 4
    $region17: #{tpu_custom_call.1} parent=1 // pred_fallthru
      _
    // Predicated region
    $region18: #{tpu_custom_call.1} parent=1 // pred_check
      _
    $region19: #{tpu_custom_call.1} parent=1 // pred_check_branch
      %62 = sbr.rel (0) target = $region21
    $region20: #{tpu_custom_call.1} parent=1 // pred_region
      %63 = dma.done [#allocation4], 128
    $region21: #{tpu_custom_call.1} parent=1 // pred_fallthru
      _
    // Predicated region
    $region22: #{tpu_custom_call.1} parent=1 // pred_check
      _
    $region23: #{tpu_custom_call.1} parent=1 // pred_check_branch
      %65 = sbr.rel (0) target = $region25
    $region24: #{tpu_custom_call.1} parent=1 // pred_region
      %66 = dma.done [#allocation7], 2048
    $region25: #{tpu_custom_call.1} parent=1 // pred_fallthru
      _
    // Predicated region
    $region26: #{tpu_custom_call.1} parent=1 // pred_check
      _
    $region27: #{tpu_custom_call.1} parent=1 // pred_check_branch
      %68 = sbr.rel (0) target = $region29
    $region28: #{tpu_custom_call.1} parent=1 // pred_region
      %69 = dma.done [#allocation7], 2048
    $region29: #{tpu_custom_call.1} parent=1 // pred_fallthru
      _
    // Predicated region
    $region30: #{tpu_custom_call.1} parent=1 // pred_check
      _
    $region31: #{tpu_custom_call.1} parent=1 // pred_check_branch
      %71 = sbr.rel (0) target = $region33
    $region32: #{tpu_custom_call.1} parent=1 // pred_region
      %72 = dma.done [#allocation10], 2048
    $region33: #{tpu_custom_call.1} parent=1 // pred_fallthru
      _
    %p74 = scmp.eq.s32.totalorder 0, 0
    // Predicated region
    $region34: #{tpu_custom_call.1} parent=1 // pred_check
      %p75 = pneg %p74
    $region35: #{tpu_custom_call.1} parent=1 // pred_check_branch
      %77 = sbr.rel (%p75) target = $region37
    $region36: #{tpu_custom_call.1} parent=1 // pred_region
      %78 = vst [vmem:[#allocation2] sm:$0xff] 0.0
      %79 = vst [vmem:[#allocation2 + $0x8] sm:$0xff] 0.0
    $region37: #{tpu_custom_call.1} parent=1 // pred_fallthru
      _
    %v80 = vld [vmem:[#allocation3] sm:$0xf]
    %v81 = vld [vmem:[#allocation3 + $0x4] sm:$0xf]
    %v82 = vld [vmem:[#allocation6] sm:$0xff]
    %v83 = vld [vmem:[#allocation6 + $0x8] sm:$0xff]
    %v84 = vld [vmem:[#allocation6 + $0x10] sm:$0xff]
    %v85 = vld [vmem:[#allocation6 + $0x18] sm:$0xff]
    %v86 = vld [vmem:[#allocation6 + $0x20] sm:$0xff]
    %v87 = vld [vmem:[#allocation6 + $0x28] sm:$0xff]
    %v88 = vld [vmem:[#allocation6 + $0x30] sm:$0xff]
    %v89 = vld [vmem:[#allocation6 + $0x38] sm:$0xff]
    %v90 = vld [vmem:[#allocation6 + $0x40] sm:$0xff]
    %v91 = vld [vmem:[#allocation6 + $0x48] sm:$0xff]
    %v92 = vld [vmem:[#allocation6 + $0x50] sm:$0xff]
    %v93 = vld [vmem:[#allocation6 + $0x58] sm:$0xff]
    %v94 = vld [vmem:[#allocation6 + $0x60] sm:$0xff]
    %v95 = vld [vmem:[#allocation6 + $0x68] sm:$0xff]
    %v96 = vld [vmem:[#allocation6 + $0x70] sm:$0xff]
    %v97 = vld [vmem:[#allocation6 + $0x78] sm:$0xff]
    %v100 = vunpack.c.l.b16 %v80
    %v101 = vunpack.c.l.b16 %v81
    %v102 = vpack.c.b16 %v101, %v100
    %v120 = vunpack.c.l.b16 %v82
    %v121 = vunpack.c.h.b16 %v82
    %v122 = vunpack.c.l.b16 %v83
    %v123 = vunpack.c.h.b16 %v83
    %v124 = vunpack.c.l.b16 %v84
    %v125 = vunpack.c.h.b16 %v84
    %v126 = vunpack.c.l.b16 %v85
    %v127 = vunpack.c.h.b16 %v85
    %v128 = vunpack.c.l.b16 %v86
    %v129 = vunpack.c.h.b16 %v86
    %v130 = vunpack.c.l.b16 %v87
    %v131 = vunpack.c.h.b16 %v87
    %v132 = vunpack.c.l.b16 %v88
    %v133 = vunpack.c.h.b16 %v88
    %v134 = vunpack.c.l.b16 %v89
    %v135 = vunpack.c.h.b16 %v89
    %v136 = vunpack.c.l.b16 %v90
    %v137 = vunpack.c.h.b16 %v90
    %v138 = vunpack.c.l.b16 %v91
    %v139 = vunpack.c.h.b16 %v91
    %v140 = vunpack.c.l.b16 %v92
    %v141 = vunpack.c.h.b16 %v92
    %v142 = vunpack.c.l.b16 %v93
    %v143 = vunpack.c.h.b16 %v93
    %v144 = vunpack.c.l.b16 %v94
    %v145 = vunpack.c.h.b16 %v94
    %v146 = vunpack.c.l.b16 %v95
    %v147 = vunpack.c.h.b16 %v95
    %v148 = vunpack.c.l.b16 %v96
    %v149 = vunpack.c.h.b16 %v96
    %v150 = vunpack.c.l.b16 %v97
    %v151 = vunpack.c.h.b16 %v97
    %v152 = vpack.c.b16 %v122, %v120
    %v153 = vpack.c.b16 %v123, %v121
    %v154 = vpack.c.b16 %v126, %v124
    %v155 = vpack.c.b16 %v127, %v125
    %v156 = vpack.c.b16 %v130, %v128
    %v157 = vpack.c.b16 %v131, %v129
    %v158 = vpack.c.b16 %v134, %v132
    %v159 = vpack.c.b16 %v135, %v133
    %v160 = vpack.c.b16 %v138, %v136
    %v161 = vpack.c.b16 %v139, %v137
    %v162 = vpack.c.b16 %v142, %v140
    %v163 = vpack.c.b16 %v143, %v141
    %v164 = vpack.c.b16 %v146, %v144
    %v165 = vpack.c.b16 %v147, %v145
    %v166 = vpack.c.b16 %v150, %v148
    %v167 = vpack.c.b16 %v151, %v149
    %184 = vmatprep.subr.bf16.mxu0 %v153
    %185 = vmatpush1.bf16.msra.mxu0 %v152
    %186 = vmatprep.subr.bf16.mxu0 %v155
    %187 = vmatpush1.bf16.msra.mxu0 %v154
    %188 = vmatprep.subr.bf16.mxu0 %v157
    %189 = vmatpush1.bf16.msra.mxu0 %v156
    %190 = vmatprep.subr.bf16.mxu0 %v159
    %191 = vmatpush1.bf16.msra.mxu0 %v158
    %192 = vmatprep.subr.bf16.mxu0 %v161
    %193 = vmatpush1.bf16.msra.mxu0 %v160
    %194 = vmatprep.subr.bf16.mxu0 %v163
    %195 = vmatpush1.bf16.msra.mxu0 %v162
    %196 = vmatprep.subr.bf16.mxu0 %v165
    %197 = vmatpush1.bf16.msra.mxu0 %v164
    %198 = vmatprep.subr.bf16.mxu0 %v167
    %199 = vmatpush1.bf16.msra.mxu0 %v166
    %200 = vmatprep.subr.bf16.mxu0 0
    %201 = vmatpush1.bf16.msra.mxu0 0
    %202 = vmatprep.subr.bf16.mxu0 0
    %203 = vmatpush1.bf16.msra.mxu0 0
    %204 = vmatprep.subr.bf16.mxu0 0
    %205 = vmatpush1.bf16.msra.mxu0 0
    %206 = vmatprep.subr.bf16.mxu0 0
    %207 = vmatpush1.bf16.msra.mxu0 0
    %208 = vmatprep.subr.bf16.mxu0 0
    %209 = vmatpush1.bf16.msra.mxu0 0
    %210 = vmatprep.subr.bf16.mxu0 0
    %211 = vmatpush1.bf16.msra.mxu0 0
    %212 = vmatprep.subr.bf16.mxu0 0
    %213 = vmatpush1.bf16.msra.mxu0 0
    %214 = vmatprep.subr.bf16.mxu0 0
    %215 = vmatpush1.bf16.msra.mxu0 0
    %216 = vmatprep.mubr.bf16.mxu0 0
    %217 = vmatmul.mubr.bf16.gmra.mrb[0].mxu0 %v102
    %v218 = vpop.f32.mrb[0].mxu0
    %v219 = vadd.f32 0.0, %v218
    %v220 = vpop.f32.mrb[0].mxu0
    %v221 = vadd.f32 0.0, %v220
    %v222 = vpop.f32.mrb[0].mxu0
    %v223 = vadd.f32 0.0, %v222
    %v224 = vpop.f32.mrb[0].mxu0
    %v225 = vadd.f32 0.0, %v224
    %226 = vdwg.mxu0
    %v227 = vld [vmem:[#allocation8] sm:$0xff]
    %v228 = vld [vmem:[#allocation8 + $0x8] sm:$0xff]
    %v229 = vld [vmem:[#allocation8 + $0x10] sm:$0xff]
    %v230 = vld [vmem:[#allocation8 + $0x18] sm:$0xff]
    %v231 = vld [vmem:[#allocation8 + $0x20] sm:$0xff]
    %v232 = vld [vmem:[#allocation8 + $0x28] sm:$0xff]
    %v233 = vld [vmem:[#allocation8 + $0x30] sm:$0xff]
    %v234 = vld [vmem:[#allocation8 + $0x38] sm:$0xff]
    %v235 = vld [vmem:[#allocation8 + $0x40] sm:$0xff]
    %v236 = vld [vmem:[#allocation8 + $0x48] sm:$0xff]
    %v237 = vld [vmem:[#allocation8 + $0x50] sm:$0xff]
    %v238 = vld [vmem:[#allocation8 + $0x58] sm:$0xff]
    %v239 = vld [vmem:[#allocation8 + $0x60] sm:$0xff]
    %v240 = vld [vmem:[#allocation8 + $0x68] sm:$0xff]
    %v241 = vld [vmem:[#allocation8 + $0x70] sm:$0xff]
    %v242 = vld [vmem:[#allocation8 + $0x78] sm:$0xff]
    %v259 = vunpack.c.l.b16 %v227
    %v260 = vunpack.c.h.b16 %v227
    %v261 = vunpack.c.l.b16 %v228
    %v262 = vunpack.c.h.b16 %v228
    %v263 = vunpack.c.l.b16 %v229
    %v264 = vunpack.c.h.b16 %v229
    %v265 = vunpack.c.l.b16 %v230
    %v266 = vunpack.c.h.b16 %v230
    %v267 = vunpack.c.l.b16 %v231
    %v268 = vunpack.c.h.b16 %v231
    %v269 = vunpack.c.l.b16 %v232
    %v270 = vunpack.c.h.b16 %v232
    %v271 = vunpack.c.l.b16 %v233
    %v272 = vunpack.c.h.b16 %v233
    %v273 = vunpack.c.l.b16 %v234
    %v274 = vunpack.c.h.b16 %v234
    %v275 = vunpack.c.l.b16 %v235
    %v276 = vunpack.c.h.b16 %v235
    %v277 = vunpack.c.l.b16 %v236
    %v278 = vunpack.c.h.b16 %v236
    %v279 = vunpack.c.l.b16 %v237
    %v280 = vunpack.c.h.b16 %v237
    %v281 = vunpack.c.l.b16 %v238
    %v282 = vunpack.c.h.b16 %v238
    %v283 = vunpack.c.l.b16 %v239
    %v284 = vunpack.c.h.b16 %v239
    %v285 = vunpack.c.l.b16 %v240
    %v286 = vunpack.c.h.b16 %v240
    %v287 = vunpack.c.l.b16 %v241
    %v288 = vunpack.c.h.b16 %v241
    %v289 = vunpack.c.l.b16 %v242
    %v290 = vunpack.c.h.b16 %v242
    %v291 = vpack.c.b16 %v261, %v259
    %v292 = vpack.c.b16 %v262, %v260
    %v293 = vpack.c.b16 %v265, %v263
    %v294 = vpack.c.b16 %v266, %v264
    %v295 = vpack.c.b16 %v269, %v267
    %v296 = vpack.c.b16 %v270, %v268
    %v297 = vpack.c.b16 %v273, %v271
    %v298 = vpack.c.b16 %v274, %v272
    %v299 = vpack.c.b16 %v277, %v275
    %v300 = vpack.c.b16 %v278, %v276
    %v301 = vpack.c.b16 %v281, %v279
    %v302 = vpack.c.b16 %v282, %v280
    %v303 = vpack.c.b16 %v285, %v283
    %v304 = vpack.c.b16 %v286, %v284
    %v305 = vpack.c.b16 %v289, %v287
    %v306 = vpack.c.b16 %v290, %v288
    %323 = vmatprep.subr.bf16.mxu0 %v292
    %324 = vmatpush1.bf16.msra.mxu0 %v291
    %325 = vmatprep.subr.bf16.mxu0 %v294
    %326 = vmatpush1.bf16.msra.mxu0 %v293
    %327 = vmatprep.subr.bf16.mxu0 %v296
    %328 = vmatpush1.bf16.msra.mxu0 %v295
    %329 = vmatprep.subr.bf16.mxu0 %v298
    %330 = vmatpush1.bf16.msra.mxu0 %v297
    %331 = vmatprep.subr.bf16.mxu0 %v300
    %332 = vmatpush1.bf16.msra.mxu0 %v299
    %333 = vmatprep.subr.bf16.mxu0 %v302
    %334 = vmatpush1.bf16.msra.mxu0 %v301
    %335 = vmatprep.subr.bf16.mxu0 %v304
    %336 = vmatpush1.bf16.msra.mxu0 %v303
    %337 = vmatprep.subr.bf16.mxu0 %v306
    %338 = vmatpush1.bf16.msra.mxu0 %v305
    %339 = vmatprep.subr.bf16.mxu0 0
    %340 = vmatpush1.bf16.msra.mxu0 0
    %341 = vmatprep.subr.bf16.mxu0 0
    %342 = vmatpush1.bf16.msra.mxu0 0
    %343 = vmatprep.subr.bf16.mxu0 0
    %344 = vmatpush1.bf16.msra.mxu0 0
    %345 = vmatprep.subr.bf16.mxu0 0
    %346 = vmatpush1.bf16.msra.mxu0 0
    %347 = vmatprep.subr.bf16.mxu0 0
    %348 = vmatpush1.bf16.msra.mxu0 0
    %349 = vmatprep.subr.bf16.mxu0 0
    %350 = vmatpush1.bf16.msra.mxu0 0
    %351 = vmatprep.subr.bf16.mxu0 0
    %352 = vmatpush1.bf16.msra.mxu0 0
    %353 = vmatprep.subr.bf16.mxu0 0
    %354 = vmatpush1.bf16.msra.mxu0 0
    %355 = vmatprep.mubr.bf16.mxu0 0
    %356 = vmatmul.mubr.bf16.gmra.mrb[0].mxu0 %v102
    %v357 = vpop.f32.mrb[0].mxu0
    %v358 = vadd.f32 0.0, %v357
    %v359 = vpop.f32.mrb[0].mxu0
    %v360 = vadd.f32 0.0, %v359
    %v361 = vpop.f32.mrb[0].mxu0
    %v362 = vadd.f32 0.0, %v361
    %v363 = vpop.f32.mrb[0].mxu0
    %v364 = vadd.f32 0.0, %v363
    %365 = vdwg.mxu0
    %v366 = vmul.f32 %v219, %v219
    %v367 = vmul.f32 %v221, %v221
    %v368 = vmul.f32 %v223, %v223
    %v369 = vmul.f32 %v225, %v225
    %v370 = vmul.f32 %v219, %v366
    %v371 = vmul.f32 %v221, %v367
    %v372 = vmul.f32 %v223, %v368
    %v373 = vmul.f32 %v225, %v369
    %v374 = vmul.f32 %v370, 0.044715
    %v375 = vmul.f32 %v371, 0.044715
    %v376 = vmul.f32 %v372, 0.044715
    %v377 = vmul.f32 %v373, 0.044715
    %v378 = vadd.f32 %v219, %v374
    %v379 = vadd.f32 %v221, %v375
    %v380 = vadd.f32 %v223, %v376
    %v381 = vadd.f32 %v225, %v377
    %v382 = vmul.f32 %v378, 0.7978846
    %v383 = vmul.f32 %v379, 0.7978846
    %v384 = vmul.f32 %v380, 0.7978846
    %v385 = vmul.f32 %v381, 0.7978846
    %v386 = vtanh.pop %v382
    %v387 = vtanh.pop %v383
    %v388 = vtanh.pop %v384
    %v389 = vtanh.pop %v385
    %v390 = vadd.f32 %v386, 1.0
    %v391 = vadd.f32 %v387, 1.0
    %v392 = vadd.f32 %v388, 1.0
    %v393 = vadd.f32 %v389, 1.0
    %v394 = vmul.f32 %v390, 0.5
    %v395 = vmul.f32 %v391, 0.5
    %v396 = vmul.f32 %v392, 0.5
    %v397 = vmul.f32 %v393, 0.5
    %v398 = vmul.f32 %v219, %v394
    %v399 = vmul.f32 %v221, %v395
    %v400 = vmul.f32 %v223, %v396
    %v401 = vmul.f32 %v225, %v397
    %v402 = vmul.f32 %v398, %v358
    %v403 = vmul.f32 %v399, %v360
    %v404 = vmul.f32 %v400, %v362
    %v405 = vmul.f32 %v401, %v364
    %v406 = vld [vmem:[#allocation2] sm:$0xff]
    %v407 = vld [vmem:[#allocation2 + $0x8] sm:$0xff]
    %v408 = vpack.c.bf16 %v404, %v402
    %v409 = vpack.c.bf16 %v405, %v403
    %v410 = vld [vmem:[#allocation9] sm:$0xf]
    %v411 = vld [vmem:[#allocation9 + $0x4] sm:$0xf]
    %v412 = vld [vmem:[#allocation9 + $0x8] sm:$0xf]
    %v413 = vld [vmem:[#allocation9 + $0xc] sm:$0xf]
    %v414 = vld [vmem:[#allocation9 + $0x10] sm:$0xf]
    %v415 = vld [vmem:[#allocation9 + $0x14] sm:$0xf]
    %v416 = vld [vmem:[#allocation9 + $0x18] sm:$0xf]
    %v417 = vld [vmem:[#allocation9 + $0x1c] sm:$0xf]
    %v418 = vld [vmem:[#allocation9 + $0x20] sm:$0xf]
    %v419 = vld [vmem:[#allocation9 + $0x24] sm:$0xf]
    %v420 = vld [vmem:[#allocation9 + $0x28] sm:$0xf]
    %v421 = vld [vmem:[#allocation9 + $0x2c] sm:$0xf]
    %v422 = vld [vmem:[#allocation9 + $0x30] sm:$0xf]
    %v423 = vld [vmem:[#allocation9 + $0x34] sm:$0xf]
    %v424 = vld [vmem:[#allocation9 + $0x38] sm:$0xf]
    %v425 = vld [vmem:[#allocation9 + $0x3c] sm:$0xf]
    %v426 = vld [vmem:[#allocation9 + $0x40] sm:$0xf]
    %v427 = vld [vmem:[#allocation9 + $0x44] sm:$0xf]
    %v428 = vld [vmem:[#allocation9 + $0x48] sm:$0xf]
    %v429 = vld [vmem:[#allocation9 + $0x4c] sm:$0xf]
    %v430 = vld [vmem:[#allocation9 + $0x50] sm:$0xf]
    %v431 = vld [vmem:[#allocation9 + $0x54] sm:$0xf]
    %v432 = vld [vmem:[#allocation9 + $0x58] sm:$0xf]
    %v433 = vld [vmem:[#allocation9 + $0x5c] sm:$0xf]
    %v434 = vld [vmem:[#allocation9 + $0x60] sm:$0xf]
    %v435 = vld [vmem:[#allocation9 + $0x64] sm:$0xf]
    %v436 = vld [vmem:[#allocation9 + $0x68] sm:$0xf]
    %v437 = vld [vmem:[#allocation9 + $0x6c] sm:$0xf]
    %v438 = vld [vmem:[#allocation9 + $0x70] sm:$0xf]
    %v439 = vld [vmem:[#allocation9 + $0x74] sm:$0xf]
    %v440 = vld [vmem:[#allocation9 + $0x78] sm:$0xf]
    %v441 = vld [vmem:[#allocation9 + $0x7c] sm:$0xf]
    %v474 = vunpack.c.l.b16 %v410
    %v475 = vunpack.c.l.b16 %v411
    %v476 = vunpack.c.l.b16 %v412
    %v477 = vunpack.c.l.b16 %v413
    %v478 = vunpack.c.l.b16 %v414
    %v479 = vunpack.c.l.b16 %v415
    %v480 = vunpack.c.l.b16 %v416
    %v481 = vunpack.c.l.b16 %v417
    %v482 = vunpack.c.l.b16 %v418
    %v483 = vunpack.c.l.b16 %v419
    %v484 = vunpack.c.l.b16 %v420
    %v485 = vunpack.c.l.b16 %v421
    %v486 = vunpack.c.l.b16 %v422
    %v487 = vunpack.c.l.b16 %v423
    %v488 = vunpack.c.l.b16 %v424
    %v489 = vunpack.c.l.b16 %v425
    %v490 = vunpack.c.l.b16 %v426
    %v491 = vunpack.c.l.b16 %v427
    %v492 = vunpack.c.l.b16 %v428
    %v493 = vunpack.c.l.b16 %v429
    %v494 = vunpack.c.l.b16 %v430
    %v495 = vunpack.c.l.b16 %v431
    %v496 = vunpack.c.l.b16 %v432
    %v497 = vunpack.c.l.b16 %v433
    %v498 = vunpack.c.l.b16 %v434
    %v499 = vunpack.c.l.b16 %v435
    %v500 = vunpack.c.l.b16 %v436
    %v501 = vunpack.c.l.b16 %v437
    %v502 = vunpack.c.l.b16 %v438
    %v503 = vunpack.c.l.b16 %v439
    %v504 = vunpack.c.l.b16 %v440
    %v505 = vunpack.c.l.b16 %v441
    %v506 = vpack.c.b16 %v475, %v474
    %v507 = vpack.c.b16 %v477, %v476
    %v508 = vpack.c.b16 %v479, %v478
    %v509 = vpack.c.b16 %v481, %v480
    %v510 = vpack.c.b16 %v483, %v482
    %v511 = vpack.c.b16 %v485, %v484
    %v512 = vpack.c.b16 %v487, %v486
    %v513 = vpack.c.b16 %v489, %v488
    %v514 = vpack.c.b16 %v491, %v490
    %v515 = vpack.c.b16 %v493, %v492
    %v516 = vpack.c.b16 %v495, %v494
    %v517 = vpack.c.b16 %v497, %v496
    %v518 = vpack.c.b16 %v499, %v498
    %v519 = vpack.c.b16 %v501, %v500
    %v520 = vpack.c.b16 %v503, %v502
    %v521 = vpack.c.b16 %v505, %v504
    %538 = vmatprep.subr.bf16.mxu0 0
    %539 = vmatpush1.bf16.msra.mxu0 %v506
    %540 = vmatprep.subr.bf16.mxu0 0
    %541 = vmatpush1.bf16.msra.mxu0 %v507
    %542 = vmatprep.subr.bf16.mxu0 0
    %543 = vmatpush1.bf16.msra.mxu0 %v508
    %544 = vmatprep.subr.bf16.mxu0 0
    %545 = vmatpush1.bf16.msra.mxu0 %v509
    %546 = vmatprep.subr.bf16.mxu0 0
    %547 = vmatpush1.bf16.msra.mxu0 %v510
    %548 = vmatprep.subr.bf16.mxu0 0
    %549 = vmatpush1.bf16.msra.mxu0 %v511
    %550 = vmatprep.subr.bf16.mxu0 0
    %551 = vmatpush1.bf16.msra.mxu0 %v512
    %552 = vmatprep.subr.bf16.mxu0 0
    %553 = vmatpush1.bf16.msra.mxu0 %v513
    %554 = vmatprep.subr.bf16.mxu0 0
    %555 = vmatpush1.bf16.msra.mxu0 %v514
    %556 = vmatprep.subr.bf16.mxu0 0
    %557 = vmatpush1.bf16.msra.mxu0 %v515
    %558 = vmatprep.subr.bf16.mxu0 0
    %559 = vmatpush1.bf16.msra.mxu0 %v516
    %560 = vmatprep.subr.bf16.mxu0 0
    %561 = vmatpush1.bf16.msra.mxu0 %v517
    %562 = vmatprep.subr.bf16.mxu0 0
    %563 = vmatpush1.bf16.msra.mxu0 %v518
    %564 = vmatprep.subr.bf16.mxu0 0
    %565 = vmatpush1.bf16.msra.mxu0 %v519
    %566 = vmatprep.subr.bf16.mxu0 0
    %567 = vmatpush1.bf16.msra.mxu0 %v520
    %568 = vmatprep.subr.bf16.mxu0 0
    %569 = vmatpush1.bf16.msra.mxu0 %v521
    %570 = vmatprep.mubr.bf16.mxu0 %v409
    %571 = vmatmul.mubr.bf16.gmra.mrb[0].mxu0 %v408
    %v572 = vpop.f32.mrb[0].mxu0
    %v573 = vadd.f32 0.0, %v572
    %v574 = vpop.f32.mrb[0].mxu0
    %v575 = vpop.f32.mrb[0].mxu0
    %v576 = vadd.f32 0.0, %v575
    %v577 = vpop.f32.mrb[0].mxu0
    %578 = vdwg.mxu0
    %v579 = vadd.f32 %v406, %v573
    %v580 = vadd.f32 %v407, %v576
    %581 = vst [vmem:[#allocation2] sm:$0xff] %v579
    %582 = vst [vmem:[#allocation2 + $0x8] sm:$0xff] %v580
    // Predicated region
    $region38: #{tpu_custom_call.1} parent=1 // pred_check
      %p583 = pneg %p74
    $region39: #{tpu_custom_call.1} parent=1 // pred_check_branch
      %585 = sbr.rel (%p583) target = $region41
    $region40: #{tpu_custom_call.1} parent=1 // pred_region
      %v586 = vld [vmem:[#allocation2] sm:$0xff]
      %v587 = vld [vmem:[#allocation2 + $0x8] sm:$0xff]
      %588 = vst [vmem:[#allocation11] sm:$0xff] %v586
      %589 = vst [vmem:[#allocation11 + $0x8] sm:$0xff] %v587
    $region41: #{tpu_custom_call.1} parent=1 // pred_fallthru
      _
    // Predicated region
    $region42: #{tpu_custom_call.1} parent=1 // pred_check
      _
    $region43: #{tpu_custom_call.1} parent=1 // pred_check_branch
      %591 = sbr.rel (0) target = $region45
    $region44: #{tpu_custom_call.1} parent=1 // pred_region
      %s593 = ssub.s32 256, 256
      %594 = vsyncadd [#allocation5], %s593
      %s595 = sshll.u32 [#allocation11], 4
      %s596 = int_to_ptr.vmem [resolvable:$true] %s595
      %601 = dma.vmem_to_hbm [thread:$0]  %s596, 256, %s4, [#allocation5], 128, 128, 8
    $region45: #{tpu_custom_call.1} parent=1 // pred_fallthru
      _
    // Predicated region
    $region46: #{tpu_custom_call.1} parent=1 // pred_check
      _
    $region47: #{tpu_custom_call.1} parent=1 // pred_check_branch
      %603 = sbr.rel (0) target = $region49
    $region48: #{tpu_custom_call.1} parent=1 // pred_region
      %604 = dma.done [#allocation5], 256
    $region49: #{tpu_custom_call.1} parent=1 // pred_fallthru
      _
    %605 = vsyncpa [#allocation4], 1
    %606 = vsyncpa [#allocation7], 1
    %607 = vsyncpa [#allocation10], 1
    %608 = vsyncpa [#allocation5], 1

</llo_original>
